<compile_context>
chip_gen: v5e
topology: v5e:2x2
jax: 0.10.0
libtpu: 0.0.40
codegen_flags: <defaults>
</compile_context>

<pallas_src>
import jax
import jax.numpy as jnp
from jax.experimental import pallas as pl
from jax.experimental.pallas import tpu as pltpu

IMAGE_SIZE = 28 * 28      # Fashion-MNIST: 784 (divisible by 8 and 16)
H0, H1, NCLS = 100, 50, 10
PAD = 128                 # lane-padded hidden / output width
TILE_B = 512              # batch tile (sweet spot for mem-bound tiling)
MIN_TB = 16               # bf16 min sublane tile


def _round_up(x, m):
    return (x + m - 1) // m * m


def _mlp_kernel(x_ref, w0_ref, b0_ref, w1_ref, b1_ref, w2_ref, b2_ref,
                mask_ref, o_ref):
    """One batch tile: 3 bf16 MXU matmuls (f32 acc) + relu + f32 log_softmax."""
    # In-kernel cast: x arrives in the caller's dtype (f32) straight from HBM;
    # the VPU cast is free (no VLIW slot is near saturation on this kernel).
    x = x_ref[...].astype(jnp.bfloat16)                                # (TB, 784)

    h0 = jnp.dot(x, w0_ref[...], preferred_element_type=jnp.float32) + b0_ref[...]
    h0 = jnp.maximum(h0, 0.0).astype(jnp.bfloat16)                     # (TB, 128)

    h1 = jnp.dot(h0, w1_ref[...], preferred_element_type=jnp.float32) + b1_ref[...]
    h1 = jnp.maximum(h1, 0.0).astype(jnp.bfloat16)                     # (TB, 128)

    h2 = jnp.dot(h1, w2_ref[...], preferred_element_type=jnp.float32) + b2_ref[...]
    h2 = jnp.maximum(h2, 0.0)                                          # (TB, 128) f32

    # log_softmax over the first NCLS lanes; padded lanes get -inf via the
    # precomputed additive mask (no per-step iota/broadcast materialization).
    logits = h2 + mask_ref[...]
    m = jnp.max(logits, axis=1, keepdims=True)
    z = logits - m
    lse = jnp.log(jnp.sum(jnp.exp(z), axis=1, keepdims=True))
    o_ref[...] = (z - lse).astype(o_ref.dtype)                         # (TB, 128) bf16


def thirddnet_forward(x, params, *, tile_b=TILE_B):
    """x: (B, ...) float, flattened to (B, IMAGE_SIZE) like torch's .view."""
    B = x.shape[0]
    x2d = x.reshape(B, IMAGE_SIZE)                 # free view-style reshape
    if x2d.dtype not in (jnp.float32, jnp.bfloat16):
        x2d = x2d.astype(jnp.float32)

    w0, b0, w1, b1, w2, b2, mask = params

    # Batch tile: multiple of 16 (bf16 sublane packing), capped at tile_b, and
    # capped again so the grid has >= 2 steps when possible (v7x 2-TC megacore).
    b_aligned = _round_up(B, MIN_TB)
    tb = min(tile_b, b_aligned)
    if b_aligned >= 2 * MIN_TB:
        tb = min(tb, _round_up(-(-B // 2), MIN_TB))
    Bp = _round_up(B, tb)
    if Bp != B:
        x2d = jnp.pad(x2d, ((0, Bp - B), (0, 0)))  # single pad, narrow dtype
    grid = (Bp // tb,)

    const2 = lambda i: (0, 0)
    weight_bytes = (w0.size + w1.size + w2.size) * 2 \
        + (b0.size + b1.size + b2.size + mask.size) * 4
    cost = pl.CostEstimate(
        flops=2 * Bp * (IMAGE_SIZE * PAD + PAD * PAD + PAD * PAD),
        transcendentals=Bp * (PAD + 1),
        bytes_accessed=Bp * IMAGE_SIZE * x2d.dtype.itemsize   # x read
        + Bp * PAD * 2                                        # bf16 out write
        + weight_bytes,
    )

    out_padded = pl.pallas_call(
        _mlp_kernel,
        out_shape=jax.ShapeDtypeStruct((Bp, PAD), jnp.bfloat16),
        grid=grid,
        in_specs=[
            pl.BlockSpec((tb, IMAGE_SIZE), lambda i: (i, 0)),  # x: batch-tiled, pipelined
            pl.BlockSpec((IMAGE_SIZE, PAD), const2),           # w0 (VMEM-resident)
            pl.BlockSpec((1, PAD), const2),                    # b0
            pl.BlockSpec((PAD, PAD), const2),                  # w1
            pl.BlockSpec((1, PAD), const2),                    # b1
            pl.BlockSpec((PAD, PAD), const2),                  # w2
            pl.BlockSpec((1, PAD), const2),                    # b2
            pl.BlockSpec((1, PAD), const2),                    # additive -inf class mask
        ],
        out_specs=pl.BlockSpec((tb, PAD), lambda i: (i, 0)),
        compiler_params=pltpu.CompilerParams(
            dimension_semantics=("parallel",)),
        cost_estimate=cost,
    )(x2d, w0, b0, w1, b1, w2, b2, mask)

    return out_padded[:B, :NCLS]  # (B, 10) bf16 log-probabilities


def init_params(key):
    """torch.nn.Linear-style init: U(-1/sqrt(fan_in), +1/sqrt(fan_in)).

    Weights are transposed to (in, out), zero-padded only on the lane (output)
    axis to PAD=128 and cast to bf16; biases stay f32 (1, PAD). Also returns
    the additive -inf class mask."""
    ks = jax.random.split(key, 6)

    def linear(kw, kb, fan_in, fan_out):
        bound = 1.0 / jnp.sqrt(jnp.float32(fan_in))
        w = jax.random.uniform(kw, (fan_in, fan_out), jnp.float32, -bound, bound)
        b = jax.random.uniform(kb, (fan_out,), jnp.float32, -bound, bound)
        return w, b

    w0, b0 = linear(ks[0], ks[1], IMAGE_SIZE, H0)   # (784, 100), (100,)
    w1, b1 = linear(ks[2], ks[3], H0, H1)           # (100,  50), ( 50,)
    w2, b2 = linear(ks[4], ks[5], H1, NCLS)         # ( 50,  10), ( 10,)

    def pad_w(w, rows, cols):
        out = jnp.zeros((rows, cols), jnp.float32)
        out = out.at[: w.shape[0], : w.shape[1]].set(w)
        return out.astype(jnp.bfloat16)

    def pad_b(b, cols):
        return jnp.zeros((1, cols), jnp.float32).at[0, : b.shape[0]].set(b)

    mask = jnp.full((1, PAD), -jnp.inf, jnp.float32).at[0, :NCLS].set(0.0)

    return (
        pad_w(w0, IMAGE_SIZE, PAD), pad_b(b0, PAD),   # no K padding (784 kept)
        pad_w(w1, PAD, PAD),        pad_b(b1, PAD),
        pad_w(w2, PAD, PAD),        pad_b(b2, PAD),
        mask,
    )


def _reference_forward(x, params):
    """Pure-JAX f32 reference using the same (bf16-cast) padded weights."""
    w0, b0, w1, b1, w2, b2, _ = params
    xf = x.reshape(x.shape[0], IMAGE_SIZE).astype(jnp.float32)
    h = jnp.maximum(xf @ w0.astype(jnp.float32) + b0[0], 0.0)
    h = jnp.maximum(h @ w1.astype(jnp.float32) + b1[0], 0.0)
    h = jnp.maximum(h @ w2.astype(jnp.float32) + b2[0], 0.0)
    return jax.nn.log_softmax(h[:, :NCLS], axis=1)


if __name__ == "__main__":
    key = jax.random.PRNGKey(0)
    k_param, k_x = jax.random.split(key)

    params = init_params(k_param)
    # Small batch of fake Fashion-MNIST images, (B, 1, 28, 28); forward
    # flattens to (B, 784) exactly as x.view(-1, image_size).
    x = jax.random.normal(k_x, (8, 1, 28, 28), jnp.float32)

    out = jax.jit(thirddnet_forward)(x, params)
    out = jax.block_until_ready(out)

    assert out.shape == (8, NCLS), out.shape
    out_f32 = out.astype(jnp.float32)

    # log_softmax rows must sum to 1 in prob space (bf16 output -> loose tol).
    assert bool(jnp.all(jnp.abs(jnp.sum(jnp.exp(out_f32), axis=1) - 1.0) < 5e-2))

    # Match the pure-JAX reference (bf16 activations/output -> ~1e-2 abs error).
    ref = _reference_forward(x, params)
    assert bool(jnp.all(jnp.abs(out_f32 - ref) < 5e-2)), float(
        jnp.max(jnp.abs(out_f32 - ref)))

    print("KERNEL_OK")
</pallas_src>

<mosaic_0001>
module attributes {stable_mosaic.version = 11 : i64} {
  func.func @_mlp_kernel(%arg0: i32, %arg1: memref<16x784xf32, #tpu.memory_space<vmem>>, %arg2: memref<784x128xbf16, #tpu.memory_space<vmem>>, %arg3: memref<1x128xf32, #tpu.memory_space<vmem>>, %arg4: memref<128x128xbf16, #tpu.memory_space<vmem>>, %arg5: memref<1x128xf32, #tpu.memory_space<vmem>>, %arg6: memref<128x128xbf16, #tpu.memory_space<vmem>>, %arg7: memref<1x128xf32, #tpu.memory_space<vmem>>, %arg8: memref<1x128xf32, #tpu.memory_space<vmem>>, %arg9: memref<16x128xbf16, #tpu.memory_space<vmem>>) attributes {dimension_semantics = [#tpu.dimension_semantics<parallel>], iteration_bounds = array<i64: 1>, scalar_prefetch = 0 : i64, scratch_operands = 0 : i64, tpu.core_type = #tpu.core_type<tc>, window_params = [{transform_indices = @transform_0, window_bounds = array<i64: 16, 784>}, {pipeline_mode = #tpu.pipeline_mode<synchronous>, transform_indices = @transform_1, window_bounds = array<i64: 784, 128>}, {pipeline_mode = #tpu.pipeline_mode<synchronous>, transform_indices = @transform_2, window_bounds = array<i64: 1, 128>}, {pipeline_mode = #tpu.pipeline_mode<synchronous>, transform_indices = @transform_3, window_bounds = array<i64: 128, 128>}, {pipeline_mode = #tpu.pipeline_mode<synchronous>, transform_indices = @transform_4, window_bounds = array<i64: 1, 128>}, {pipeline_mode = #tpu.pipeline_mode<synchronous>, transform_indices = @transform_5, window_bounds = array<i64: 128, 128>}, {pipeline_mode = #tpu.pipeline_mode<synchronous>, transform_indices = @transform_6, window_bounds = array<i64: 1, 128>}, {pipeline_mode = #tpu.pipeline_mode<synchronous>, transform_indices = @transform_7, window_bounds = array<i64: 1, 128>}, {transform_indices = @transform_8, window_bounds = array<i64: 16, 128>}]} {
    %c0 = arith.constant 0 : index
    %c0_0 = arith.constant 0 : index
    %0 = vector.load %arg1[%c0, %c0_0] : memref<16x784xf32, #tpu.memory_space<vmem>>, vector<16x784xf32>
    %1 = arith.truncf %0 : vector<16x784xf32> to vector<16x784xbf16>
    %c0_1 = arith.constant 0 : index
    %c0_2 = arith.constant 0 : index
    %2 = vector.load %arg2[%c0_1, %c0_2] : memref<784x128xbf16, #tpu.memory_space<vmem>>, vector<784x128xbf16>
    %cst = arith.constant dense<0.000000e+00> : vector<16x128xf32>
    %3 = tpu.matmul %1, %2, %cst {dimension_numbers = #tpu.dot_dimension_numbers<[1], [0], [0], [1], [0, 0, 1, 1], [], []>} : vector<16x784xbf16>, vector<784x128xbf16>, vector<16x128xf32> -> vector<16x128xf32>
    %c0_3 = arith.constant 0 : index
    %c0_4 = arith.constant 0 : index
    %4 = vector.load %arg3[%c0_3, %c0_4] : memref<1x128xf32, #tpu.memory_space<vmem>>, vector<1x128xf32>
    %5 = vector.broadcast %4 : vector<1x128xf32> to vector<16x128xf32>
    %6 = arith.addf %3, %5 : vector<16x128xf32>
    %cst_5 = arith.constant 0.000000e+00 : f32
    %7 = vector.broadcast %cst_5 : f32 to vector<16x128xf32>
    %8 = arith.maximumf %6, %7 : vector<16x128xf32>
    %9 = arith.truncf %8 : vector<16x128xf32> to vector<16x128xbf16>
    %c0_6 = arith.constant 0 : index
    %c0_7 = arith.constant 0 : index
    %10 = vector.load %arg4[%c0_6, %c0_7] : memref<128x128xbf16, #tpu.memory_space<vmem>>, vector<128x128xbf16>
    %cst_8 = arith.constant dense<0.000000e+00> : vector<16x128xf32>
    %11 = tpu.matmul %9, %10, %cst_8 {dimension_numbers = #tpu.dot_dimension_numbers<[1], [0], [0], [1], [0, 0, 1, 1], [], []>} : vector<16x128xbf16>, vector<128x128xbf16>, vector<16x128xf32> -> vector<16x128xf32>
    %c0_9 = arith.constant 0 : index
    %c0_10 = arith.constant 0 : index
    %12 = vector.load %arg5[%c0_9, %c0_10] : memref<1x128xf32, #tpu.memory_space<vmem>>, vector<1x128xf32>
    %13 = vector.broadcast %12 : vector<1x128xf32> to vector<16x128xf32>
    %14 = arith.addf %11, %13 : vector<16x128xf32>
    %cst_11 = arith.constant 0.000000e+00 : f32
    %15 = vector.broadcast %cst_11 : f32 to vector<16x128xf32>
    %16 = arith.maximumf %14, %15 : vector<16x128xf32>
    %17 = arith.truncf %16 : vector<16x128xf32> to vector<16x128xbf16>
    %c0_12 = arith.constant 0 : index
    %c0_13 = arith.constant 0 : index
    %18 = vector.load %arg6[%c0_12, %c0_13] : memref<128x128xbf16, #tpu.memory_space<vmem>>, vector<128x128xbf16>
    %cst_14 = arith.constant dense<0.000000e+00> : vector<16x128xf32>
    %19 = tpu.matmul %17, %18, %cst_14 {dimension_numbers = #tpu.dot_dimension_numbers<[1], [0], [0], [1], [0, 0, 1, 1], [], []>} : vector<16x128xbf16>, vector<128x128xbf16>, vector<16x128xf32> -> vector<16x128xf32>
    %c0_15 = arith.constant 0 : index
    %c0_16 = arith.constant 0 : index
    %20 = vector.load %arg7[%c0_15, %c0_16] : memref<1x128xf32, #tpu.memory_space<vmem>>, vector<1x128xf32>
    %21 = vector.broadcast %20 : vector<1x128xf32> to vector<16x128xf32>
    %22 = arith.addf %19, %21 : vector<16x128xf32>
    %cst_17 = arith.constant 0.000000e+00 : f32
    %23 = vector.broadcast %cst_17 : f32 to vector<16x128xf32>
    %24 = arith.maximumf %22, %23 : vector<16x128xf32>
    %c0_18 = arith.constant 0 : index
    %c0_19 = arith.constant 0 : index
    %25 = vector.load %arg8[%c0_18, %c0_19] : memref<1x128xf32, #tpu.memory_space<vmem>>, vector<1x128xf32>
    %26 = vector.broadcast %25 : vector<1x128xf32> to vector<16x128xf32>
    %27 = arith.addf %24, %26 : vector<16x128xf32>
    %cst_20 = arith.constant dense<0xFF800000> : vector<16xf32>
    %28 = vector.multi_reduction <maximumf>, %27, %cst_20 [1] : vector<16x128xf32> to vector<16xf32>
    %29 = vector.shape_cast %28 : vector<16xf32> to vector<16x1xf32>
    %30 = vector.broadcast %29 : vector<16x1xf32> to vector<16x128xf32>
    %31 = arith.subf %27, %30 : vector<16x128xf32>
    %32 = math.exp %31 : vector<16x128xf32>
    %cst_21 = arith.constant dense<0.000000e+00> : vector<16xf32>
    %33 = vector.multi_reduction <add>, %32, %cst_21 [1] : vector<16x128xf32> to vector<16xf32>
    %34 = vector.shape_cast %33 : vector<16xf32> to vector<16x1xf32>
    %35 = math.log %34 : vector<16x1xf32>
    %36 = vector.broadcast %35 : vector<16x1xf32> to vector<16x128xf32>
    %37 = arith.subf %31, %36 : vector<16x128xf32>
    %38 = arith.truncf %37 : vector<16x128xf32> to vector<16x128xbf16>
    %c0_22 = arith.constant 0 : index
    %c0_23 = arith.constant 0 : index
    %39 = vector.load %arg9[%c0_22, %c0_23] : memref<16x128xbf16, #tpu.memory_space<vmem>>, vector<16x128xbf16>
    tpu.vector_store %arg9[%c0_22, %c0_23], %38 {strides = array<i32>} : memref<16x128xbf16, #tpu.memory_space<vmem>>, vector<16x128xbf16>,
    return
  }
  func.func @transform_0(%arg0: i32) -> (i32, i32) {
    %c0_i32 = arith.constant 0 : i32
    %c0_i32_0 = arith.constant 0 : i32
    return %arg0, %c0_i32 : i32, i32
  }
  func.func @transform_1(%arg0: i32) -> (i32, i32) {
    %c0_i32 = arith.constant 0 : i32
    %c0_i32_0 = arith.constant 0 : i32
    %c0_i32_1 = arith.constant 0 : i32
    return %c0_i32, %c0_i32_0 : i32, i32
  }
  func.func @transform_2(%arg0: i32) -> (i32, i32) {
    %c0_i32 = arith.constant 0 : i32
    %c0_i32_0 = arith.constant 0 : i32
    %c0_i32_1 = arith.constant 0 : i32
    return %c0_i32, %c0_i32_0 : i32, i32
  }
  func.func @transform_3(%arg0: i32) -> (i32, i32) {
    %c0_i32 = arith.constant 0 : i32
    %c0_i32_0 = arith.constant 0 : i32
    %c0_i32_1 = arith.constant 0 : i32
    return %c0_i32, %c0_i32_0 : i32, i32
  }
  func.func @transform_4(%arg0: i32) -> (i32, i32) {
    %c0_i32 = arith.constant 0 : i32
    %c0_i32_0 = arith.constant 0 : i32
    %c0_i32_1 = arith.constant 0 : i32
    return %c0_i32, %c0_i32_0 : i32, i32
  }
  func.func @transform_5(%arg0: i32) -> (i32, i32) {
    %c0_i32 = arith.constant 0 : i32
    %c0_i32_0 = arith.constant 0 : i32
    %c0_i32_1 = arith.constant 0 : i32
    return %c0_i32, %c0_i32_0 : i32, i32
  }
  func.func @transform_6(%arg0: i32) -> (i32, i32) {
    %c0_i32 = arith.constant 0 : i32
    %c0_i32_0 = arith.constant 0 : i32
    %c0_i32_1 = arith.constant 0 : i32
    return %c0_i32, %c0_i32_0 : i32, i32
  }
  func.func @transform_7(%arg0: i32) -> (i32, i32) {
    %c0_i32 = arith.constant 0 : i32
    %c0_i32_0 = arith.constant 0 : i32
    %c0_i32_1 = arith.constant 0 : i32
    return %c0_i32, %c0_i32_0 : i32, i32
  }
  func.func @transform_8(%arg0: i32) -> (i32, i32) {
    %c0_i32 = arith.constant 0 : i32
    %c0_i32_0 = arith.constant 0 : i32
    return %arg0, %c0_i32 : i32, i32
  }
}

</mosaic_0001>

<llo_original>
// kernel: thirddnet_forward.1
$region0: #{thirddnet_forward.1}
  #allocation0 [shape = 'u32[]', space=smem, size = 0x4, offset = 0x4, fixed_abs, tag = 'smem constant byte address 0x4 - core index']
  #allocation1 [shape = 'u32[72,128]{1,0:T(1,128)}', space=vmem, size = 0x9000, scoped, tag = 'internal scratch']
  %s0 = inlined_call_operand.vmem [shape: f32[16,784], index: 0, kind: input, shape index: {}]
  %s1 = inlined_call_operand.vmem [shape: bf16[784,128], index: 1, kind: input, shape index: {}]
  %s2 = inlined_call_operand.vmem [shape: f32[1,128], index: 2, kind: input, shape index: {}]
  %s3 = inlined_call_operand.vmem [shape: bf16[128,128], index: 3, kind: input, shape index: {}]
  %s4 = inlined_call_operand.vmem [shape: f32[1,128], index: 4, kind: input, shape index: {}]
  %s5 = inlined_call_operand.vmem [shape: bf16[128,128], index: 5, kind: input, shape index: {}]
  %s6 = inlined_call_operand.vmem [shape: f32[1,128], index: 6, kind: input, shape index: {}]
  %s7 = inlined_call_operand.vmem [shape: f32[1,128], index: 7, kind: input, shape index: {}]
  %s8 = inlined_call_operand.vmem [shape: bf16[16,128], index: 8, kind: output, shape index: {}]
  %s9 = sld [smem:[#allocation0]]
  $region42: #{thirddnet_forward.1} parent=0
    _
  %s11 = ssub.s32 1, %s9
  %s12 = scalar_select 0, %s11, %s9
  // Predicated region
  $region2: #{thirddnet_forward.1} parent=0 // pred_check
    _
  $region3: #{thirddnet_forward.1} parent=0 // pred_check_branch
    %14 = sbr.rel (0) target = $region5
  $region4: #{thirddnet_forward.1} parent=0 // pred_region
    _
  $region5: #{thirddnet_forward.1} parent=0 // pred_fallthru
    _
  // Predicated region
  $region6: #{thirddnet_forward.1} parent=0 // pred_check
    _
  $region7: #{thirddnet_forward.1} parent=0 // pred_check_branch
    %16 = sbr.rel (0) target = $region9
  $region8: #{thirddnet_forward.1} parent=0 // pred_region
    _
  $region9: #{thirddnet_forward.1} parent=0 // pred_fallthru
    _
  // Predicated region
  $region10: #{thirddnet_forward.1} parent=0 // pred_check
    _
  $region11: #{thirddnet_forward.1} parent=0 // pred_check_branch
    %18 = sbr.rel (0) target = $region13
  $region12: #{thirddnet_forward.1} parent=0 // pred_region
    _
  $region13: #{thirddnet_forward.1} parent=0 // pred_fallthru
    _
  // Predicated region
  $region14: #{thirddnet_forward.1} parent=0 // pred_check
    _
  $region15: #{thirddnet_forward.1} parent=0 // pred_check_branch
    %20 = sbr.rel (0) target = $region17
  $region16: #{thirddnet_forward.1} parent=0 // pred_region
    _
  $region17: #{thirddnet_forward.1} parent=0 // pred_fallthru
    _
  // Predicated region
  $region18: #{thirddnet_forward.1} parent=0 // pred_check
    _
  $region19: #{thirddnet_forward.1} parent=0 // pred_check_branch
    %22 = sbr.rel (0) target = $region21
  $region20: #{thirddnet_forward.1} parent=0 // pred_region
    _
  $region21: #{thirddnet_forward.1} parent=0 // pred_fallthru
    _
  // Predicated region
  $region22: #{thirddnet_forward.1} parent=0 // pred_check
    _
  $region23: #{thirddnet_forward.1} parent=0 // pred_check_branch
    %24 = sbr.rel (0) target = $region25
  $region24: #{thirddnet_forward.1} parent=0 // pred_region
    _
  $region25: #{thirddnet_forward.1} parent=0 // pred_fallthru
    _
  // Predicated region
  $region26: #{thirddnet_forward.1} parent=0 // pred_check
    _
  $region27: #{thirddnet_forward.1} parent=0 // pred_check_branch
    %26 = sbr.rel (0) target = $region29
  $region28: #{thirddnet_forward.1} parent=0 // pred_region
    _
  $region29: #{thirddnet_forward.1} parent=0 // pred_fallthru
    _
  // Predicated region
  $region30: #{thirddnet_forward.1} parent=0 // pred_check
    _
  $region31: #{thirddnet_forward.1} parent=0 // pred_check_branch
    %28 = sbr.rel (0) target = $region33
  $region32: #{thirddnet_forward.1} parent=0 // pred_region
    _
  $region33: #{thirddnet_forward.1} parent=0 // pred_fallthru
    _
  %v30 = vld [vmem:[%s0] sm:$0xff]
  %v31 = vld [vmem:[%s0 + $0x8] sm:$0xff]
  %v32 = vld [vmem:[%s0 + $0x10] sm:$0xff]
  %v33 = vld [vmem:[%s0 + $0x18] sm:$0xff]
  %v34 = vld [vmem:[%s0 + $0x20] sm:$0xff]
  %v35 = vld [vmem:[%s0 + $0x28] sm:$0xff]
  %v36 = vld [vmem:[%s0 + $0x30] sm:$0xff]
  %v37 = vld [vmem:[%s0 + $0x38] sm:$0xff]
  %v38 = vld [vmem:[%s0 + $0x40] sm:$0xff]
  %v39 = vld [vmem:[%s0 + $0x48] sm:$0xff]
  %v40 = vld [vmem:[%s0 + $0x50] sm:$0xff]
  %v41 = vld [vmem:[%s0 + $0x58] sm:$0xff]
  %v42 = vld [vmem:[%s0 + $0x60] sm:$0xff]
  %v43 = vld [vmem:[%s0 + $0x68] sm:$0xff]
  %v44 = vpack.c.bf16 %v37, %v30
  %v45 = vpack.c.bf16 %v38, %v31
  %v46 = vpack.c.bf16 %v39, %v32
  %v47 = vpack.c.bf16 %v40, %v33
  %v48 = vpack.c.bf16 %v41, %v34
  %v49 = vpack.c.bf16 %v42, %v35
  %v50 = vpack.c.bf16 %v43, %v36
  %v51 = vld [vmem:[%s1] sm:$0xf]
  %v52 = vld [vmem:[%s1 + $0x4] sm:$0xf]
  %v53 = vld [vmem:[%s1 + $0x8] sm:$0xf]
  %v54 = vld [vmem:[%s1 + $0xc] sm:$0xf]
  %v55 = vld [vmem:[%s1 + $0x10] sm:$0xf]
  %v56 = vld [vmem:[%s1 + $0x14] sm:$0xf]
  %v57 = vld [vmem:[%s1 + $0x18] sm:$0xf]
  %v58 = vld [vmem:[%s1 + $0x1c] sm:$0xf]
  %v59 = vld [vmem:[%s1 + $0x20] sm:$0xf]
  %v60 = vld [vmem:[%s1 + $0x24] sm:$0xf]
  %v61 = vld [vmem:[%s1 + $0x28] sm:$0xf]
  %v62 = vld [vmem:[%s1 + $0x2c] sm:$0xf]
  %v63 = vld [vmem:[%s1 + $0x30] sm:$0xf]
  %v64 = vld [vmem:[%s1 + $0x34] sm:$0xf]
  %v65 = vld [vmem:[%s1 + $0x38] sm:$0xf]
  %v66 = vld [vmem:[%s1 + $0x3c] sm:$0xf]
  %v67 = vld [vmem:[%s1 + $0x40] sm:$0xf]
  %v68 = vld [vmem:[%s1 + $0x44] sm:$0xf]
  %v69 = vld [vmem:[%s1 + $0x48] sm:$0xf]
  %v70 = vld [vmem:[%s1 + $0x4c] sm:$0xf]
  %v71 = vld [vmem:[%s1 + $0x50] sm:$0xf]
  %v72 = vld [vmem:[%s1 + $0x54] sm:$0xf]
  %v73 = vld [vmem:[%s1 + $0x58] sm:$0xf]
  %v74 = vld [vmem:[%s1 + $0x5c] sm:$0xf]
  %v75 = vld [vmem:[%s1 + $0x60] sm:$0xf]
  %v76 = vld [vmem:[%s1 + $0x64] sm:$0xf]
  %v77 = vld [vmem:[%s1 + $0x68] sm:$0xf]
  %v78 = vld [vmem:[%s1 + $0x6c] sm:$0xf]
  %v79 = vld [vmem:[%s1 + $0x70] sm:$0xf]
  %v80 = vld [vmem:[%s1 + $0x74] sm:$0xf]
  %v81 = vld [vmem:[%s1 + $0x78] sm:$0xf]
  %v82 = vld [vmem:[%s1 + $0x7c] sm:$0xf]
  %v83 = vld [vmem:[%s1 + $0x80] sm:$0xf]
  %v84 = vld [vmem:[%s1 + $0x84] sm:$0xf]
  %v85 = vld [vmem:[%s1 + $0x88] sm:$0xf]
  %v86 = vld [vmem:[%s1 + $0x8c] sm:$0xf]
  %v87 = vld [vmem:[%s1 + $0x90] sm:$0xf]
  %v88 = vld [vmem:[%s1 + $0x94] sm:$0xf]
  %v89 = vld [vmem:[%s1 + $0x98] sm:$0xf]
  %v90 = vld [vmem:[%s1 + $0x9c] sm:$0xf]
  %v91 = vld [vmem:[%s1 + $0xa0] sm:$0xf]
  %v92 = vld [vmem:[%s1 + $0xa4] sm:$0xf]
  %v93 = vld [vmem:[%s1 + $0xa8] sm:$0xf]
  %v94 = vld [vmem:[%s1 + $0xac] sm:$0xf]
  %v95 = vld [vmem:[%s1 + $0xb0] sm:$0xf]
  %v96 = vld [vmem:[%s1 + $0xb4] sm:$0xf]
  %v97 = vld [vmem:[%s1 + $0xb8] sm:$0xf]
  %v98 = vld [vmem:[%s1 + $0xbc] sm:$0xf]
  %v99 = vld [vmem:[%s1 + $0xc0] sm:$0xf]
  %v100 = vld [vmem:[%s1 + $0xc4] sm:$0xf]
  %v101 = vld [vmem:[%s1 + $0xc8] sm:$0xf]
  %v102 = vld [vmem:[%s1 + $0xcc] sm:$0xf]
  %v103 = vld [vmem:[%s1 + $0xd0] sm:$0xf]
  %v104 = vld [vmem:[%s1 + $0xd4] sm:$0xf]
  %v105 = vld [vmem:[%s1 + $0xd8] sm:$0xf]
  %v106 = vld [vmem:[%s1 + $0xdc] sm:$0xf]
  %v107 = vld [vmem:[%s1 + $0xe0] sm:$0xf]
  %v108 = vld [vmem:[%s1 + $0xe4] sm:$0xf]
  %v109 = vld [vmem:[%s1 + $0xe8] sm:$0xf]
  %v110 = vld [vmem:[%s1 + $0xec] sm:$0xf]
  %v111 = vld [vmem:[%s1 + $0xf0] sm:$0xf]
  %v112 = vld [vmem:[%s1 + $0xf4] sm:$0xf]
  %v113 = vld [vmem:[%s1 + $0xf8] sm:$0xf]
  %v114 = vld [vmem:[%s1 + $0xfc] sm:$0xf]
  %v115 = vld [vmem:[%s1 + $0x100] sm:$0xf]
  %v116 = vld [vmem:[%s1 + $0x104] sm:$0xf]
  %v117 = vld [vmem:[%s1 + $0x108] sm:$0xf]
  %v118 = vld [vmem:[%s1 + $0x10c] sm:$0xf]
  %v119 = vld [vmem:[%s1 + $0x110] sm:$0xf]
  %v120 = vld [vmem:[%s1 + $0x114] sm:$0xf]
  %v121 = vld [vmem:[%s1 + $0x118] sm:$0xf]
  %v122 = vld [vmem:[%s1 + $0x11c] sm:$0xf]
  %v123 = vld [vmem:[%s1 + $0x120] sm:$0xf]
  %v124 = vld [vmem:[%s1 + $0x124] sm:$0xf]
  %v125 = vld [vmem:[%s1 + $0x128] sm:$0xf]
  %v126 = vld [vmem:[%s1 + $0x12c] sm:$0xf]
  %v127 = vld [vmem:[%s1 + $0x130] sm:$0xf]
  %v128 = vld [vmem:[%s1 + $0x134] sm:$0xf]
  %v129 = vld [vmem:[%s1 + $0x138] sm:$0xf]
  %v130 = vld [vmem:[%s1 + $0x13c] sm:$0xf]
  %v131 = vld [vmem:[%s1 + $0x140] sm:$0xf]
  %v132 = vld [vmem:[%s1 + $0x144] sm:$0xf]
  %v133 = vld [vmem:[%s1 + $0x148] sm:$0xf]
  %v134 = vld [vmem:[%s1 + $0x14c] sm:$0xf]
  %v135 = vld [vmem:[%s1 + $0x150] sm:$0xf]
  %v136 = vld [vmem:[%s1 + $0x154] sm:$0xf]
  %v137 = vld [vmem:[%s1 + $0x158] sm:$0xf]
  %v138 = vld [vmem:[%s1 + $0x15c] sm:$0xf]
  %v139 = vld [vmem:[%s1 + $0x160] sm:$0xf]
  %v140 = vld [vmem:[%s1 + $0x164] sm:$0xf]
  %v141 = vld [vmem:[%s1 + $0x168] sm:$0xf]
  %v142 = vld [vmem:[%s1 + $0x16c] sm:$0xf]
  %v143 = vld [vmem:[%s1 + $0x170] sm:$0xf]
  %v144 = vld [vmem:[%s1 + $0x174] sm:$0xf]
  %v145 = vld [vmem:[%s1 + $0x178] sm:$0xf]
  %v146 = vld [vmem:[%s1 + $0x17c] sm:$0xf]
  %v147 = vld [vmem:[%s1 + $0x180] sm:$0xf]
  %v148 = vld [vmem:[%s1 + $0x184] sm:$0xf]
  %v149 = vld [vmem:[%s2] sm:$0x1]
  %v151 = vperm.slane %v149, 0
  %v251 = vunpack.c.l.b16 %v51
  %v252 = vunpack.c.l.b16 %v52
  %v253 = vunpack.c.l.b16 %v53
  %v254 = vunpack.c.l.b16 %v54
  %v255 = vunpack.c.l.b16 %v55
  %v256 = vunpack.c.l.b16 %v56
  %v257 = vunpack.c.l.b16 %v57
  %v258 = vunpack.c.l.b16 %v58
  %v259 = vunpack.c.l.b16 %v59
  %v260 = vunpack.c.l.b16 %v60
  %v261 = vunpack.c.l.b16 %v61
  %v262 = vunpack.c.l.b16 %v62
  %v263 = vunpack.c.l.b16 %v63
  %v264 = vunpack.c.l.b16 %v64
  %v265 = vunpack.c.l.b16 %v65
  %v266 = vunpack.c.l.b16 %v66
  %v267 = vunpack.c.l.b16 %v67
  %v268 = vunpack.c.l.b16 %v68
  %v269 = vunpack.c.l.b16 %v69
  %v270 = vunpack.c.l.b16 %v70
  %v271 = vunpack.c.l.b16 %v71
  %v272 = vunpack.c.l.b16 %v72
  %v273 = vunpack.c.l.b16 %v73
  %v274 = vunpack.c.l.b16 %v74
  %v275 = vunpack.c.l.b16 %v75
  %v276 = vunpack.c.l.b16 %v76
  %v277 = vunpack.c.l.b16 %v77
  %v278 = vunpack.c.l.b16 %v78
  %v279 = vunpack.c.l.b16 %v79
  %v280 = vunpack.c.l.b16 %v80
  %v281 = vunpack.c.l.b16 %v81
  %v282 = vunpack.c.l.b16 %v82
  %v283 = vunpack.c.l.b16 %v83
  %v284 = vunpack.c.l.b16 %v84
  %v285 = vunpack.c.l.b16 %v85
  %v286 = vunpack.c.l.b16 %v86
  %v287 = vunpack.c.l.b16 %v87
  %v288 = vunpack.c.l.b16 %v88
  %v289 = vunpack.c.l.b16 %v89
  %v290 = vunpack.c.l.b16 %v90
  %v291 = vunpack.c.l.b16 %v91
  %v292 = vunpack.c.l.b16 %v92
  %v293 = vunpack.c.l.b16 %v93
  %v294 = vunpack.c.l.b16 %v94
  %v295 = vunpack.c.l.b16 %v95
  %v296 = vunpack.c.l.b16 %v96
  %v297 = vunpack.c.l.b16 %v97
  %v298 = vunpack.c.l.b16 %v98
  %v299 = vunpack.c.l.b16 %v99
  %v300 = vunpack.c.l.b16 %v100
  %v301 = vunpack.c.l.b16 %v101
  %v302 = vunpack.c.l.b16 %v102
  %v303 = vunpack.c.l.b16 %v103
  %v304 = vunpack.c.l.b16 %v104
  %v305 = vunpack.c.l.b16 %v105
  %v306 = vunpack.c.l.b16 %v106
  %v307 = vunpack.c.l.b16 %v107
  %v308 = vunpack.c.l.b16 %v108
  %v309 = vunpack.c.l.b16 %v109
  %v310 = vunpack.c.l.b16 %v110
  %v311 = vunpack.c.l.b16 %v111
  %v312 = vunpack.c.l.b16 %v112
  %v313 = vunpack.c.l.b16 %v113
  %v314 = vunpack.c.l.b16 %v114
  %v315 = vunpack.c.l.b16 %v115
  %v316 = vunpack.c.l.b16 %v116
  %v317 = vunpack.c.l.b16 %v117
  %v318 = vunpack.c.l.b16 %v118
  %v319 = vunpack.c.l.b16 %v119
  %v320 = vunpack.c.l.b16 %v120
  %v321 = vunpack.c.l.b16 %v121
  %v322 = vunpack.c.l.b16 %v122
  %v323 = vunpack.c.l.b16 %v123
  %v324 = vunpack.c.l.b16 %v124
  %v325 = vunpack.c.l.b16 %v125
  %v326 = vunpack.c.l.b16 %v126
  %v327 = vunpack.c.l.b16 %v127
  %v328 = vunpack.c.l.b16 %v128
  %v329 = vunpack.c.l.b16 %v129
  %v330 = vunpack.c.l.b16 %v130
  %v331 = vunpack.c.l.b16 %v131
  %v332 = vunpack.c.l.b16 %v132
  %v333 = vunpack.c.l.b16 %v133
  %v334 = vunpack.c.l.b16 %v134
  %v335 = vunpack.c.l.b16 %v135
  %v336 = vunpack.c.l.b16 %v136
  %v337 = vunpack.c.l.b16 %v137
  %v338 = vunpack.c.l.b16 %v138
  %v339 = vunpack.c.l.b16 %v139
  %v340 = vunpack.c.l.b16 %v140
  %v341 = vunpack.c.l.b16 %v141
  %v342 = vunpack.c.l.b16 %v142
  %v343 = vunpack.c.l.b16 %v143
  %v344 = vunpack.c.l.b16 %v144
  %v345 = vunpack.c.l.b16 %v145
  %v346 = vunpack.c.l.b16 %v146
  %v347 = vunpack.c.l.b16 %v147
  %v348 = vunpack.c.l.b16 %v148
  %v349 = vpack.c.b16 %v252, %v251
  %v350 = vpack.c.b16 %v254, %v253
  %v351 = vpack.c.b16 %v256, %v255
  %v352 = vpack.c.b16 %v258, %v257
  %v353 = vpack.c.b16 %v260, %v259
  %v354 = vpack.c.b16 %v262, %v261
  %v355 = vpack.c.b16 %v264, %v263
  %v356 = vpack.c.b16 %v266, %v265
  %v357 = vpack.c.b16 %v268, %v267
  %v358 = vpack.c.b16 %v270, %v269
  %v359 = vpack.c.b16 %v272, %v271
  %v360 = vpack.c.b16 %v274, %v273
  %v361 = vpack.c.b16 %v276, %v275
  %v362 = vpack.c.b16 %v278, %v277
  %v363 = vpack.c.b16 %v280, %v279
  %v364 = vpack.c.b16 %v282, %v281
  %v365 = vpack.c.b16 %v284, %v283
  %v366 = vpack.c.b16 %v286, %v285
  %v367 = vpack.c.b16 %v288, %v287
  %v368 = vpack.c.b16 %v290, %v289
  %v369 = vpack.c.b16 %v292, %v291
  %v370 = vpack.c.b16 %v294, %v293
  %v371 = vpack.c.b16 %v296, %v295
  %v372 = vpack.c.b16 %v298, %v297
  %v373 = vpack.c.b16 %v300, %v299
  %v374 = vpack.c.b16 %v302, %v301
  %v375 = vpack.c.b16 %v304, %v303
  %v376 = vpack.c.b16 %v306, %v305
  %v377 = vpack.c.b16 %v308, %v307
  %v378 = vpack.c.b16 %v310, %v309
  %v379 = vpack.c.b16 %v312, %v311
  %v380 = vpack.c.b16 %v314, %v313
  %v381 = vpack.c.b16 %v316, %v315
  %v382 = vpack.c.b16 %v318, %v317
  %v383 = vpack.c.b16 %v320, %v319
  %v384 = vpack.c.b16 %v322, %v321
  %v385 = vpack.c.b16 %v324, %v323
  %v386 = vpack.c.b16 %v326, %v325
  %v387 = vpack.c.b16 %v328, %v327
  %v388 = vpack.c.b16 %v330, %v329
  %v389 = vpack.c.b16 %v332, %v331
  %v390 = vpack.c.b16 %v334, %v333
  %v391 = vpack.c.b16 %v336, %v335
  %v392 = vpack.c.b16 %v338, %v337
  %v393 = vpack.c.b16 %v340, %v339
  %v394 = vpack.c.b16 %v342, %v341
  %v395 = vpack.c.b16 %v344, %v343
  %v396 = vpack.c.b16 %v346, %v345
  %v397 = vpack.c.b16 %v348, %v347
  %vm447 = vcmask 130048
  %v449 = vsel %vm447, %v50, 0
  %451 = vmatpush.bf16.msra.mxu0 %v356
  %452 = vmatpush.bf16.msra.mxu0 %v355
  %453 = vmatpush.bf16.msra.mxu0 %v354
  %454 = vmatpush.bf16.msra.mxu0 %v353
  %455 = vmatpush.bf16.msra.mxu0 %v352
  %456 = vmatpush.bf16.msra.mxu0 %v351
  %457 = vmatpush.bf16.msra.mxu0 %v350
  %458 = vmatpush.bf16.msra.mxu0 %v349
  %459 = vmatmul.bf16.gmra.mxu0 %v44
  %v460 = vpop.f32.mrf.mxu0
  %v461 = vadd.f32 %v151, %v460
  %v462 = vpop.f32.mrf.mxu0
  %v463 = vadd.f32 %v151, %v462
  %464 = vdwg.mxu0
  %465 = vmatpush.bf16.msra.mxu0 %v364
  %466 = vmatpush.bf16.msra.mxu0 %v363
  %467 = vmatpush.bf16.msra.mxu0 %v362
  %468 = vmatpush.bf16.msra.mxu0 %v361
  %469 = vmatpush.bf16.msra.mxu0 %v360
  %470 = vmatpush.bf16.msra.mxu0 %v359
  %471 = vmatpush.bf16.msra.mxu0 %v358
  %472 = vmatpush.bf16.msra.mxu0 %v357
  %473 = vmatmul.bf16.gmra.mxu0 %v45
  %v474 = vpop.f32.mrf.mxu0
  %v475 = vadd.f32 %v461, %v474
  %v476 = vpop.f32.mrf.mxu0
  %v477 = vadd.f32 %v463, %v476
  %478 = vdwg.mxu0
  %479 = vmatpush.bf16.msra.mxu0 %v372
  %480 = vmatpush.bf16.msra.mxu0 %v371
  %481 = vmatpush.bf16.msra.mxu0 %v370
  %482 = vmatpush.bf16.msra.mxu0 %v369
  %483 = vmatpush.bf16.msra.mxu0 %v368
  %484 = vmatpush.bf16.msra.mxu0 %v367
  %485 = vmatpush.bf16.msra.mxu0 %v366
  %486 = vmatpush.bf16.msra.mxu0 %v365
  %487 = vmatmul.bf16.gmra.mxu0 %v46
  %v488 = vpop.f32.mrf.mxu0
  %v489 = vadd.f32 %v475, %v488
  %v490 = vpop.f32.mrf.mxu0
  %v491 = vadd.f32 %v477, %v490
  %492 = vdwg.mxu0
  %493 = vmatpush.bf16.msra.mxu0 %v380
  %494 = vmatpush.bf16.msra.mxu0 %v379
  %495 = vmatpush.bf16.msra.mxu0 %v378
  %496 = vmatpush.bf16.msra.mxu0 %v377
  %497 = vmatpush.bf16.msra.mxu0 %v376
  %498 = vmatpush.bf16.msra.mxu0 %v375
  %499 = vmatpush.bf16.msra.mxu0 %v374
  %500 = vmatpush.bf16.msra.mxu0 %v373
  %501 = vmatmul.bf16.gmra.mxu0 %v47
  %v502 = vpop.f32.mrf.mxu0
  %v503 = vadd.f32 %v489, %v502
  %v504 = vpop.f32.mrf.mxu0
  %v505 = vadd.f32 %v491, %v504
  %506 = vdwg.mxu0
  %507 = vmatpush.bf16.msra.mxu0 %v388
  %508 = vmatpush.bf16.msra.mxu0 %v387
  %509 = vmatpush.bf16.msra.mxu0 %v386
  %510 = vmatpush.bf16.msra.mxu0 %v385
  %511 = vmatpush.bf16.msra.mxu0 %v384
  %512 = vmatpush.bf16.msra.mxu0 %v383
  %513 = vmatpush.bf16.msra.mxu0 %v382
  %514 = vmatpush.bf16.msra.mxu0 %v381
  %515 = vmatmul.bf16.gmra.mxu0 %v48
  %v516 = vpop.f32.mrf.mxu0
  %v517 = vadd.f32 %v503, %v516
  %v518 = vpop.f32.mrf.mxu0
  %v519 = vadd.f32 %v505, %v518
  %520 = vdwg.mxu0
  %521 = vmatpush.bf16.msra.mxu0 %v396
  %522 = vmatpush.bf16.msra.mxu0 %v395
  %523 = vmatpush.bf16.msra.mxu0 %v394
  %524 = vmatpush.bf16.msra.mxu0 %v393
  %525 = vmatpush.bf16.msra.mxu0 %v392
  %526 = vmatpush.bf16.msra.mxu0 %v391
  %527 = vmatpush.bf16.msra.mxu0 %v390
  %528 = vmatpush.bf16.msra.mxu0 %v389
  %529 = vmatmul.bf16.gmra.mxu0 %v49
  %v530 = vpop.f32.mrf.mxu0
  %v531 = vadd.f32 %v517, %v530
  %v532 = vpop.f32.mrf.mxu0
  %v533 = vadd.f32 %v519, %v532
  %534 = vdwg.mxu0
  %535 = vmatpush.bf16.msra.mxu0 0
  %536 = vmatpush.bf16.msra.mxu0 0
  %537 = vmatpush.bf16.msra.mxu0 0
  %538 = vmatpush.bf16.msra.mxu0 0
  %539 = vmatpush.bf16.msra.mxu0 0
  %540 = vmatpush.bf16.msra.mxu0 0
  %541 = vmatpush.bf16.msra.mxu0 0
  %542 = vmatpush.bf16.msra.mxu0 %v397
  %543 = vmatmul.bf16.gmra.mxu0 %v449
  %v544 = vpop.f32.mrf.mxu0
  %v545 = vadd.f32 %v531, %v544
  %v546 = vpop.f32.mrf.mxu0
  %v547 = vadd.f32 %v533, %v546
  %548 = vdwg.mxu0
  %v549 = vmax.f32 %v545, 0.0
  %v550 = vmax.f32 %v547, 0.0
  %v551 = vpack.c.bf16 %v550, %v549
  %v552 = vld [vmem:[%s3] sm:$0xf]
  %v553 = vld [vmem:[%s3 + $0x4] sm:$0xf]
  %v554 = vld [vmem:[%s3 + $0x8] sm:$0xf]
  %v555 = vld [vmem:[%s3 + $0xc] sm:$0xf]
  %v556 = vld [vmem:[%s3 + $0x10] sm:$0xf]
  %v557 = vld [vmem:[%s3 + $0x14] sm:$0xf]
  %v558 = vld [vmem:[%s3 + $0x18] sm:$0xf]
  %v559 = vld [vmem:[%s3 + $0x1c] sm:$0xf]
  %v560 = vld [vmem:[%s3 + $0x20] sm:$0xf]
  %v561 = vld [vmem:[%s3 + $0x24] sm:$0xf]
  %v562 = vld [vmem:[%s3 + $0x28] sm:$0xf]
  %v563 = vld [vmem:[%s3 + $0x2c] sm:$0xf]
  %v564 = vld [vmem:[%s3 + $0x30] sm:$0xf]
  %v565 = vld [vmem:[%s3 + $0x34] sm:$0xf]
  %v566 = vld [vmem:[%s3 + $0x38] sm:$0xf]
  %v567 = vld [vmem:[%s3 + $0x3c] sm:$0xf]
  %v568 = vld [vmem:[%s4] sm:$0x1]
  %v570 = vperm.slane %v568, 0
  %v588 = vunpack.c.l.b16 %v552
  %v589 = vunpack.c.l.b16 %v553
  %v590 = vunpack.c.l.b16 %v554
  %v591 = vunpack.c.l.b16 %v555
  %v592 = vunpack.c.l.b16 %v556
  %v593 = vunpack.c.l.b16 %v557
  %v594 = vunpack.c.l.b16 %v558
  %v595 = vunpack.c.l.b16 %v559
  %v596 = vunpack.c.l.b16 %v560
  %v597 = vunpack.c.l.b16 %v561
  %v598 = vunpack.c.l.b16 %v562
  %v599 = vunpack.c.l.b16 %v563
  %v600 = vunpack.c.l.b16 %v564
  %v601 = vunpack.c.l.b16 %v565
  %v602 = vunpack.c.l.b16 %v566
  %v603 = vunpack.c.l.b16 %v567
  %v604 = vpack.c.b16 %v589, %v588
  %v605 = vpack.c.b16 %v591, %v590
  %v606 = vpack.c.b16 %v593, %v592
  %v607 = vpack.c.b16 %v595, %v594
  %v608 = vpack.c.b16 %v597, %v596
  %v609 = vpack.c.b16 %v599, %v598
  %v610 = vpack.c.b16 %v601, %v600
  %v611 = vpack.c.b16 %v603, %v602
  %620 = vmatpush.bf16.msra.mxu0 %v611
  %621 = vmatpush.bf16.msra.mxu0 %v610
  %622 = vmatpush.bf16.msra.mxu0 %v609
  %623 = vmatpush.bf16.msra.mxu0 %v608
  %624 = vmatpush.bf16.msra.mxu0 %v607
  %625 = vmatpush.bf16.msra.mxu0 %v606
  %626 = vmatpush.bf16.msra.mxu0 %v605
  %627 = vmatpush.bf16.msra.mxu0 %v604
  %628 = vmatmul.bf16.gmra.mxu0 %v551
  %v629 = vpop.f32.mrf.mxu0
  %v630 = vadd.f32 %v570, %v629
  %v631 = vpop.f32.mrf.mxu0
  %v632 = vadd.f32 %v570, %v631
  %633 = vdwg.mxu0
  %v634 = vmax.f32 %v630, 0.0
  %v635 = vmax.f32 %v632, 0.0
  %v636 = vpack.c.bf16 %v635, %v634
  %v637 = vld [vmem:[%s5] sm:$0xf]
  %v638 = vld [vmem:[%s5 + $0x4] sm:$0xf]
  %v639 = vld [vmem:[%s5 + $0x8] sm:$0xf]
  %v640 = vld [vmem:[%s5 + $0xc] sm:$0xf]
  %v641 = vld [vmem:[%s5 + $0x10] sm:$0xf]
  %v642 = vld [vmem:[%s5 + $0x14] sm:$0xf]
  %v643 = vld [vmem:[%s5 + $0x18] sm:$0xf]
  %v644 = vld [vmem:[%s5 + $0x1c] sm:$0xf]
  %v645 = vld [vmem:[%s5 + $0x20] sm:$0xf]
  %v646 = vld [vmem:[%s5 + $0x24] sm:$0xf]
  %v647 = vld [vmem:[%s5 + $0x28] sm:$0xf]
  %v648 = vld [vmem:[%s5 + $0x2c] sm:$0xf]
  %v649 = vld [vmem:[%s5 + $0x30] sm:$0xf]
  %v650 = vld [vmem:[%s5 + $0x34] sm:$0xf]
  %v651 = vld [vmem:[%s5 + $0x38] sm:$0xf]
  %v652 = vld [vmem:[%s5 + $0x3c] sm:$0xf]
  %v653 = vld [vmem:[%s6] sm:$0x1]
  %v655 = vperm.slane %v653, 0
  %v673 = vunpack.c.l.b16 %v637
  %v674 = vunpack.c.l.b16 %v638
  %v675 = vunpack.c.l.b16 %v639
  %v676 = vunpack.c.l.b16 %v640
  %v677 = vunpack.c.l.b16 %v641
  %v678 = vunpack.c.l.b16 %v642
  %v679 = vunpack.c.l.b16 %v643
  %v680 = vunpack.c.l.b16 %v644
  %v681 = vunpack.c.l.b16 %v645
  %v682 = vunpack.c.l.b16 %v646
  %v683 = vunpack.c.l.b16 %v647
  %v684 = vunpack.c.l.b16 %v648
  %v685 = vunpack.c.l.b16 %v649
  %v686 = vunpack.c.l.b16 %v650
  %v687 = vunpack.c.l.b16 %v651
  %v688 = vunpack.c.l.b16 %v652
  %v689 = vpack.c.b16 %v674, %v673
  %v690 = vpack.c.b16 %v676, %v675
  %v691 = vpack.c.b16 %v678, %v677
  %v692 = vpack.c.b16 %v680, %v679
  %v693 = vpack.c.b16 %v682, %v681
  %v694 = vpack.c.b16 %v684, %v683
  %v695 = vpack.c.b16 %v686, %v685
  %v696 = vpack.c.b16 %v688, %v687
  %705 = vmatpush.bf16.msra.mxu0 %v696
  %706 = vmatpush.bf16.msra.mxu0 %v695
  %707 = vmatpush.bf16.msra.mxu0 %v694
  %708 = vmatpush.bf16.msra.mxu0 %v693
  %709 = vmatpush.bf16.msra.mxu0 %v692
  %710 = vmatpush.bf16.msra.mxu0 %v691
  %711 = vmatpush.bf16.msra.mxu0 %v690
  %712 = vmatpush.bf16.msra.mxu0 %v689
  %713 = vmatmul.bf16.gmra.mxu0 %v636
  %v714 = vpop.f32.mrf.mxu0
  %v715 = vadd.f32 %v655, %v714
  %v716 = vpop.f32.mrf.mxu0
  %v717 = vadd.f32 %v655, %v716
  %718 = vdwg.mxu0
  %v719 = vmax.f32 %v715, 0.0
  %v720 = vmax.f32 %v717, 0.0
  %v721 = vld [vmem:[%s7] sm:$0x1]
  %v723 = vperm.slane %v721, 0
  %v725 = vadd.f32 %v719, %v723
  %v726 = vadd.f32 %v720, %v723
  %727 = vmax.xlane.f32.xlu0 %v725
  %v728 = vpop.xlane.xlu0 %727
  %729 = vmax.xlane.f32.xlu0 %v726
  %v730 = vpop.xlane.xlu0 %729
  %v731 = vsub.f32 %v725, %v728
  %v732 = vsub.f32 %v726, %v730
  %v733 = vmul.f32 %v731, 1.442695
  %v734 = vpow.pop %v733
  %v735 = vmul.f32 %v732, 1.442695
  %v736 = vpow.pop %v735
  %737 = vadd.xlane.f32.xlu0 %v734
  %v738 = vpop.xlane.xlu0 %737
  %739 = vadd.xlane.f32.xlu0 %v736
  %v740 = vpop.xlane.xlu0 %739
  %v741 = vlog2.pop %v738
  %v742 = vmul.f32 %v741, 0.6931472
  %v743 = vlog2.pop %v740
  %v744 = vmul.f32 %v743, 0.6931472
  %v745 = vsub.f32 %v731, %v742
  %v746 = vsub.f32 %v732, %v744
  %v747 = vpack.c.bf16 %v745, %v745
  %v748 = vpack.c.bf16 %v746, %v746
  %749 = vst [vmem:[%s8] sm:$0xf] %v747
  %750 = vst [vmem:[%s8 + $0x4] sm:$0xf] %v748
  // Predicated region
  $region34: #{thirddnet_forward.1} parent=0 // pred_check
    _
  $region35: #{thirddnet_forward.1} parent=0 // pred_check_branch
    %752 = sbr.rel (0) target = $region37
  $region36: #{thirddnet_forward.1} parent=0 // pred_region
    _
  $region37: #{thirddnet_forward.1} parent=0 // pred_fallthru
    _
  // Predicated region
  $region38: #{thirddnet_forward.1} parent=0 // pred_check
    _
  $region39: #{thirddnet_forward.1} parent=0 // pred_check_branch
    %754 = sbr.rel (0) target = $region41
  $region40: #{thirddnet_forward.1} parent=0 // pred_region
    _
  $region41: #{thirddnet_forward.1} parent=0 // pred_fallthru
    _

</llo_original>
